<compile_context>
chip_gen: v5e
topology: v5e:2x2
jax: 0.10.0
libtpu: 0.0.40
codegen_flags: <defaults>
</compile_context>

<pallas_src>
import jax
import jax.numpy as jnp
from jax import lax
from jax.experimental import pallas as pl
from jax.experimental.pallas import tpu as pltpu


def _graph_head_kernel(x_ref, w1_ref, b1_ref, w2_ref, b2_ref, o_ref):
    """One N-tile of: relu(x @ W1^T + b1) @ W2^T + b2 (eval-mode dropout = id)."""
    # lin1: contract x's last axis with W1's last axis (W1 is [out, in]),
    # i.e. x @ W1^T directly on the MXU -- no wrapper transpose needed.
    h = lax.dot_general(
        x_ref[...], w1_ref[...],
        dimension_numbers=(((1,), (1,)), ((), ())),
        preferred_element_type=jnp.float32,
    )
    # Bias + ReLU in f32 (no accidental downcast of the intermediate).
    h = jnp.maximum(h + b1_ref[...].astype(jnp.float32), 0.0)
    # TODO(synk): training-mode dropout (pltpu.prng_seed + prng_random_bits mask)
    # not implemented; this kernel covers eval mode only.
    # lin2: f32 intermediate against native-shape W2 (C, H); output is (tn, C).
    out = lax.dot_general(
        h, w2_ref[...].astype(jnp.float32),
        dimension_numbers=(((1,), (1,)), ((), ())),
        preferred_element_type=jnp.float32,
    )
    o_ref[...] = (out + b2_ref[...].astype(jnp.float32)).astype(o_ref.dtype)


def _round_up(v, m):
    return ((v + m - 1) // m) * m


def graph_head_forward(x, w1, b1, w2, b2, *, tile_n=2048):
    """DefaultGraphHead.forward (eval mode).

    x:  [N, H]   w1: [H, H]  b1: [H]
    w2: [C, H]   b2: [C]     -> [N, C]   (output dtype == x.dtype)
    """
    N, H = x.shape
    C = w2.shape[0]

    # Matmul operand dtypes must match for the first dot; biases / W2 are cast
    # to f32 inside the kernel so they can stay in their original dtype.
    w1 = w1.astype(x.dtype)
    b1r = b1.reshape(1, H)
    b2r = b2.reshape(1, C)

    # ---- tile selection -----------------------------------------------------
    # Never collapse to a single full-N block for large N (VMEM safety): tn is
    # capped by tile_n, kept a multiple of 8 (sublane alignment).  The partial
    # last tile (N % tn != 0) is bounds-masked by Pallas -- no wrapper padding
    # or post-kernel slice pass over HBM.
    tn = min(_round_up(tile_n, 8), _round_up(N, 8))
    num_tiles = pl.cdiv(N, tn)
    # v7x megacore: the "parallel" axis is split across 2 TensorCores; prefer
    # an even tile count when N is large enough to split at all.
    if num_tiles > 1 and num_tiles % 2 == 1:
        tn = _round_up(pl.cdiv(N, num_tiles + 1), 8)
        num_tiles = pl.cdiv(N, tn)
    grid = (num_tiles,)

    # ---- compiler hints -----------------------------------------------------
    in_bytes = jnp.dtype(x.dtype).itemsize
    lanes_h = _round_up(H, 128)      # VMEM last-dim is lane-padded to 128
    lanes_c = _round_up(C, 128)
    vmem_est = tn * (2 * lanes_h * in_bytes      # double-buffered x tiles
                     + lanes_h * 4               # f32 intermediate h
                     + 2 * lanes_c * in_bytes)   # double-buffered out tiles
    vmem_est += 2 * (1 << 20)                    # resident weights/biases + slack
    vmem_limit = int(min(64 << 20, max(16 << 20, 2 * vmem_est)))

    cost = pl.CostEstimate(
        flops=2 * N * H * (H + C),
        transcendentals=0,
        bytes_accessed=N * (H + C) * in_bytes + (H * H + H + C * H + C) * 4,
    )

    return pl.pallas_call(
        _graph_head_kernel,
        out_shape=jax.ShapeDtypeStruct((N, C), x.dtype),
        grid=grid,
        in_specs=[
            pl.BlockSpec((tn, H), lambda i: (i, 0)),   # x tiles (pipelined)
            pl.BlockSpec((H, H), lambda i: (0, 0)),    # W1 resident in VMEM
            pl.BlockSpec((1, H), lambda i: (0, 0)),    # b1 resident
            pl.BlockSpec((C, H), lambda i: (0, 0)),    # W2 resident (native shape)
            pl.BlockSpec((1, C), lambda i: (0, 0)),    # b2 resident
        ],
        out_specs=pl.BlockSpec((tn, C), lambda i: (i, 0)),
        compiler_params=pltpu.CompilerParams(
            # Independent N tiles -> parallel axis (sharded across TCs on v7x).
            dimension_semantics=("parallel",),
            vmem_limit_bytes=vmem_limit,
        ),
        cost_estimate=cost,
    )(x, w1, b1r, w2, b2r)


def reference_forward(x, w1, b1, w2, b2):
    h = jnp.maximum(x @ w1.T + b1, 0.0)
    return h @ w2.T + b2


if __name__ == "__main__":
    # Module-consistent small shapes: hidden_channels=32, num_classes=10.
    H, C = 32, 10
    key = jax.random.PRNGKey(0)
    kx, kw1, kb1, kw2, kb2 = jax.random.split(key, 5)

    w1 = jax.random.uniform(kw1, (H, H), jnp.float32, -1.0, 1.0) / jnp.sqrt(H)
    b1 = jax.random.uniform(kb1, (H,), jnp.float32, -1.0, 1.0) / jnp.sqrt(H)
    w2 = jax.random.uniform(kw2, (C, H), jnp.float32, -1.0, 1.0) / jnp.sqrt(H)
    b2 = jax.random.uniform(kb2, (C,), jnp.float32, -1.0, 1.0) / jnp.sqrt(H)

    # 1) Default tiling (single tile since N < tile_n): unpadded (N, C) output.
    N = 256
    x = jax.random.normal(kx, (N, H), dtype=jnp.float32)
    out = jax.block_until_ready(graph_head_forward(x, w1, b1, w2, b2))
    ref = reference_forward(x, w1, b1, w2, b2)
    assert out.shape == (N, C)
    assert jnp.allclose(out, ref, atol=1e-5, rtol=1e-5), "default-tile mismatch"

    # 2) Multi-tile grid with a partial last tile (1000 rows, 128-row tiles,
    #    8 even tiles) -- exercises pipelining + Pallas bounds masking.
    x2 = jax.random.normal(jax.random.PRNGKey(1), (1000, H), dtype=jnp.float32)
    out2 = jax.block_until_ready(graph_head_forward(x2, w1, b1, w2, b2, tile_n=128))
    ref2 = reference_forward(x2, w1, b1, w2, b2)
    assert out2.shape == (1000, C)
    assert jnp.allclose(out2, ref2, atol=1e-5, rtol=1e-5), "multi-tile mismatch"

    # 3) Odd tile count rebalanced to even (640 rows / 128 -> 5 tiles -> 6x112).
    x3 = jax.random.normal(jax.random.PRNGKey(2), (640, H), dtype=jnp.float32)
    out3 = jax.block_until_ready(graph_head_forward(x3, w1, b1, w2, b2, tile_n=128))
    ref3 = reference_forward(x3, w1, b1, w2, b2)
    assert jnp.allclose(out3, ref3, atol=1e-5, rtol=1e-5), "rebalanced-tile mismatch"

    # 4) Small batch (N=8, not a multiple of 128): single small block.
    xs = jax.random.normal(jax.random.PRNGKey(3), (8, H), dtype=jnp.float32)
    outs = jax.block_until_ready(graph_head_forward(xs, w1, b1, w2, b2))
    refs = reference_forward(xs, w1, b1, w2, b2)
    assert outs.shape == (8, C)
    assert jnp.allclose(outs, refs, atol=1e-5, rtol=1e-5), "small-batch mismatch"

    # 5) bf16 input/output path (halves HBM bytes); f32 accumulation inside.
    xb = x.astype(jnp.bfloat16)
    outb = jax.block_until_ready(
        graph_head_forward(xb, w1.astype(jnp.bfloat16), b1, w2, b2))
    assert outb.dtype == jnp.bfloat16 and outb.shape == (N, C)
    assert jnp.allclose(outb.astype(jnp.float32), ref, atol=2e-1, rtol=5e-2), \
        "bf16 mismatch"

    print("KERNEL_OK")
</pallas_src>

<mosaic_0001>
module attributes {stable_mosaic.version = 11 : i64} {
  func.func @_graph_head_kernel(%arg0: i32, %arg1: memref<256x32xf32, #tpu.memory_space<vmem>>, %arg2: memref<32x32xf32, #tpu.memory_space<vmem>>, %arg3: memref<1x32xf32, #tpu.memory_space<vmem>>, %arg4: memref<10x32xf32, #tpu.memory_space<vmem>>, %arg5: memref<1x10xf32, #tpu.memory_space<vmem>>, %arg6: memref<256x10xf32, #tpu.memory_space<vmem>>) attributes {dimension_semantics = [#tpu.dimension_semantics<parallel>], iteration_bounds = array<i64: 1>, scalar_prefetch = 0 : i64, scratch_operands = 0 : i64, tpu.core_type = #tpu.core_type<tc>, window_params = [{transform_indices = @transform_0, window_bounds = array<i64: 256, 32>}, {pipeline_mode = #tpu.pipeline_mode<synchronous>, transform_indices = @transform_1, window_bounds = array<i64: 32, 32>}, {pipeline_mode = #tpu.pipeline_mode<synchronous>, transform_indices = @transform_2, window_bounds = array<i64: 1, 32>}, {pipeline_mode = #tpu.pipeline_mode<synchronous>, transform_indices = @transform_3, window_bounds = array<i64: 10, 32>}, {pipeline_mode = #tpu.pipeline_mode<synchronous>, transform_indices = @transform_4, window_bounds = array<i64: 1, 10>}, {transform_indices = @transform_5, window_bounds = array<i64: 256, 10>}]} {
    %c0 = arith.constant 0 : index
    %c0_0 = arith.constant 0 : index
    %0 = vector.load %arg1[%c0, %c0_0] : memref<256x32xf32, #tpu.memory_space<vmem>>, vector<256x32xf32>
    %c0_1 = arith.constant 0 : index
    %c0_2 = arith.constant 0 : index
    %1 = vector.load %arg2[%c0_1, %c0_2] : memref<32x32xf32, #tpu.memory_space<vmem>>, vector<32x32xf32>
    %cst = arith.constant dense<0.000000e+00> : vector<256x32xf32>
    %2 = tpu.matmul %0, %1, %cst {dimension_numbers = #tpu.dot_dimension_numbers<[1], [1], [0], [0], [0, 0, 1, 0], [], []>} : vector<256x32xf32>, vector<32x32xf32>, vector<256x32xf32> -> vector<256x32xf32>
    %c0_3 = arith.constant 0 : index
    %c0_4 = arith.constant 0 : index
    %3 = vector.load %arg3[%c0_3, %c0_4] : memref<1x32xf32, #tpu.memory_space<vmem>>, vector<1x32xf32>
    %4 = vector.broadcast %3 : vector<1x32xf32> to vector<256x32xf32>
    %5 = arith.addf %2, %4 : vector<256x32xf32>
    %cst_5 = arith.constant 0.000000e+00 : f32
    %6 = vector.broadcast %cst_5 : f32 to vector<256x32xf32>
    %7 = arith.maximumf %5, %6 : vector<256x32xf32>
    %c0_6 = arith.constant 0 : index
    %c0_7 = arith.constant 0 : index
    %8 = vector.load %arg4[%c0_6, %c0_7] : memref<10x32xf32, #tpu.memory_space<vmem>>, vector<10x32xf32>
    %cst_8 = arith.constant dense<0.000000e+00> : vector<256x10xf32>
    %9 = tpu.matmul %7, %8, %cst_8 {dimension_numbers = #tpu.dot_dimension_numbers<[1], [1], [0], [0], [0, 0, 1, 0], [], []>} : vector<256x32xf32>, vector<10x32xf32>, vector<256x10xf32> -> vector<256x10xf32>
    %c0_9 = arith.constant 0 : index
    %c0_10 = arith.constant 0 : index
    %10 = vector.load %arg5[%c0_9, %c0_10] : memref<1x10xf32, #tpu.memory_space<vmem>>, vector<1x10xf32>
    %11 = vector.broadcast %10 : vector<1x10xf32> to vector<256x10xf32>
    %12 = arith.addf %9, %11 : vector<256x10xf32>
    %c0_11 = arith.constant 0 : index
    %c0_12 = arith.constant 0 : index
    %13 = vector.load %arg6[%c0_11, %c0_12] : memref<256x10xf32, #tpu.memory_space<vmem>>, vector<256x10xf32>
    tpu.vector_store %arg6[%c0_11, %c0_12], %12 {strides = array<i32>} : memref<256x10xf32, #tpu.memory_space<vmem>>, vector<256x10xf32>,
    return
  }
  func.func @transform_0(%arg0: i32) -> (i32, i32) {
    %c0_i32 = arith.constant 0 : i32
    %c0_i32_0 = arith.constant 0 : i32
    return %arg0, %c0_i32 : i32, i32
  }
  func.func @transform_1(%arg0: i32) -> (i32, i32) {
    %c0_i32 = arith.constant 0 : i32
    %c0_i32_0 = arith.constant 0 : i32
    %c0_i32_1 = arith.constant 0 : i32
    return %c0_i32, %c0_i32_0 : i32, i32
  }
  func.func @transform_2(%arg0: i32) -> (i32, i32) {
    %c0_i32 = arith.constant 0 : i32
    %c0_i32_0 = arith.constant 0 : i32
    %c0_i32_1 = arith.constant 0 : i32
    return %c0_i32, %c0_i32_0 : i32, i32
  }
  func.func @transform_3(%arg0: i32) -> (i32, i32) {
    %c0_i32 = arith.constant 0 : i32
    %c0_i32_0 = arith.constant 0 : i32
    %c0_i32_1 = arith.constant 0 : i32
    return %c0_i32, %c0_i32_0 : i32, i32
  }
  func.func @transform_4(%arg0: i32) -> (i32, i32) {
    %c0_i32 = arith.constant 0 : i32
    %c0_i32_0 = arith.constant 0 : i32
    %c0_i32_1 = arith.constant 0 : i32
    return %c0_i32, %c0_i32_0 : i32, i32
  }
  func.func @transform_5(%arg0: i32) -> (i32, i32) {
    %c0_i32 = arith.constant 0 : i32
    %c0_i32_0 = arith.constant 0 : i32
    return %arg0, %c0_i32 : i32, i32
  }
}

</mosaic_0001>

<llo_original>
// kernel: tpu_custom_call.1
$region0: #{tpu_custom_call.1}
  #allocation0 [shape = 'u32[]', space=smem, size = 0x4, offset = 0x4, fixed_abs, tag = 'smem constant byte address 0x4 - core index']
  #allocation1 [shape = 'u32[72,128]{1,0:T(1,128)}', space=vmem, size = 0x9000, scoped, tag = 'internal scratch']
  %s0 = inlined_call_operand.vmem [shape: f32[256,32], index: 0, kind: input, shape index: {}]
  %s1 = inlined_call_operand.vmem [shape: f32[32,32], index: 1, kind: input, shape index: {}]
  %s2 = inlined_call_operand.vmem [shape: f32[1,32], index: 2, kind: input, shape index: {}]
  %s3 = inlined_call_operand.vmem [shape: f32[10,32], index: 3, kind: input, shape index: {}]
  %s4 = inlined_call_operand.vmem [shape: f32[1,10], index: 4, kind: input, shape index: {}]
  %s5 = inlined_call_operand.vmem [shape: f32[256,10], index: 5, kind: output, shape index: {}]
  %s6 = sld [smem:[#allocation0]]
  $region30: #{tpu_custom_call.1} parent=0
    _
  %s8 = ssub.s32 1, %s6
  %s9 = scalar_select 0, %s8, %s6
  // Predicated region
  $region2: #{tpu_custom_call.1} parent=0 // pred_check
    _
  $region3: #{tpu_custom_call.1} parent=0 // pred_check_branch
    %11 = sbr.rel (0) target = $region5
  $region4: #{tpu_custom_call.1} parent=0 // pred_region
    _
  $region5: #{tpu_custom_call.1} parent=0 // pred_fallthru
    _
  // Predicated region
  $region6: #{tpu_custom_call.1} parent=0 // pred_check
    _
  $region7: #{tpu_custom_call.1} parent=0 // pred_check_branch
    %13 = sbr.rel (0) target = $region9
  $region8: #{tpu_custom_call.1} parent=0 // pred_region
    _
  $region9: #{tpu_custom_call.1} parent=0 // pred_fallthru
    _
  // Predicated region
  $region10: #{tpu_custom_call.1} parent=0 // pred_check
    _
  $region11: #{tpu_custom_call.1} parent=0 // pred_check_branch
    %15 = sbr.rel (0) target = $region13
  $region12: #{tpu_custom_call.1} parent=0 // pred_region
    _
  $region13: #{tpu_custom_call.1} parent=0 // pred_fallthru
    _
  // Predicated region
  $region14: #{tpu_custom_call.1} parent=0 // pred_check
    _
  $region15: #{tpu_custom_call.1} parent=0 // pred_check_branch
    %17 = sbr.rel (0) target = $region17
  $region16: #{tpu_custom_call.1} parent=0 // pred_region
    _
  $region17: #{tpu_custom_call.1} parent=0 // pred_fallthru
    _
  // Predicated region
  $region18: #{tpu_custom_call.1} parent=0 // pred_check
    _
  $region19: #{tpu_custom_call.1} parent=0 // pred_check_branch
    %19 = sbr.rel (0) target = $region21
  $region20: #{tpu_custom_call.1} parent=0 // pred_region
    _
  $region21: #{tpu_custom_call.1} parent=0 // pred_fallthru
    _
  %v20 = vld [vmem:[%s0] sm:$0xff]
  %v21 = vld [vmem:[%s0 + $0x8] sm:$0xff]
  %v22 = vld [vmem:[%s0 + $0x10] sm:$0xff]
  %v23 = vld [vmem:[%s0 + $0x18] sm:$0xff]
  %v24 = vld [vmem:[%s0 + $0x20] sm:$0xff]
  %v25 = vld [vmem:[%s0 + $0x28] sm:$0xff]
  %v26 = vld [vmem:[%s0 + $0x30] sm:$0xff]
  %v27 = vld [vmem:[%s0 + $0x38] sm:$0xff]
  %v28 = vld [vmem:[%s0 + $0x40] sm:$0xff]
  %v29 = vld [vmem:[%s0 + $0x48] sm:$0xff]
  %v30 = vld [vmem:[%s0 + $0x50] sm:$0xff]
  %v31 = vld [vmem:[%s0 + $0x58] sm:$0xff]
  %v32 = vld [vmem:[%s0 + $0x60] sm:$0xff]
  %v33 = vld [vmem:[%s0 + $0x68] sm:$0xff]
  %v34 = vld [vmem:[%s0 + $0x70] sm:$0xff]
  %v35 = vld [vmem:[%s0 + $0x78] sm:$0xff]
  %v36 = vld [vmem:[%s0 + $0x80] sm:$0xff]
  %v37 = vld [vmem:[%s0 + $0x88] sm:$0xff]
  %v38 = vld [vmem:[%s0 + $0x90] sm:$0xff]
  %v39 = vld [vmem:[%s0 + $0x98] sm:$0xff]
  %v40 = vld [vmem:[%s0 + $0xa0] sm:$0xff]
  %v41 = vld [vmem:[%s0 + $0xa8] sm:$0xff]
  %v42 = vld [vmem:[%s0 + $0xb0] sm:$0xff]
  %v43 = vld [vmem:[%s0 + $0xb8] sm:$0xff]
  %v44 = vld [vmem:[%s0 + $0xc0] sm:$0xff]
  %v45 = vld [vmem:[%s0 + $0xc8] sm:$0xff]
  %v46 = vld [vmem:[%s0 + $0xd0] sm:$0xff]
  %v47 = vld [vmem:[%s0 + $0xd8] sm:$0xff]
  %v48 = vld [vmem:[%s0 + $0xe0] sm:$0xff]
  %v49 = vld [vmem:[%s0 + $0xe8] sm:$0xff]
  %v50 = vld [vmem:[%s0 + $0xf0] sm:$0xff]
  %v51 = vld [vmem:[%s0 + $0xf8] sm:$0xff]
  %v52 = vld [vmem:[%s1] sm:$0xff]
  %v53 = vld [vmem:[%s1 + $0x8] sm:$0xff]
  %v54 = vld [vmem:[%s1 + $0x10] sm:$0xff]
  %v55 = vld [vmem:[%s1 + $0x18] sm:$0xff]
  %v56 = vld [vmem:[%s2] sm:$0x1]
  %v58 = vperm.slane %v56, 0
  %vm60 = vcmask 261120
  %v62 = vsel %vm60, %v20, 0
  %v65 = vsel %vm60, %v21, 0
  %v68 = vsel %vm60, %v22, 0
  %v71 = vsel %vm60, %v23, 0
  %v74 = vsel %vm60, %v24, 0
  %v77 = vsel %vm60, %v25, 0
  %v80 = vsel %vm60, %v26, 0
  %v83 = vsel %vm60, %v27, 0
  %v86 = vsel %vm60, %v28, 0
  %v89 = vsel %vm60, %v29, 0
  %v92 = vsel %vm60, %v30, 0
  %v95 = vsel %vm60, %v31, 0
  %v98 = vsel %vm60, %v32, 0
  %v101 = vsel %vm60, %v33, 0
  %v104 = vsel %vm60, %v34, 0
  %v107 = vsel %vm60, %v35, 0
  %v110 = vsel %vm60, %v36, 0
  %v113 = vsel %vm60, %v37, 0
  %v116 = vsel %vm60, %v38, 0
  %v119 = vsel %vm60, %v39, 0
  %v122 = vsel %vm60, %v40, 0
  %v125 = vsel %vm60, %v41, 0
  %v128 = vsel %vm60, %v42, 0
  %v131 = vsel %vm60, %v43, 0
  %v134 = vsel %vm60, %v44, 0
  %v137 = vsel %vm60, %v45, 0
  %v140 = vsel %vm60, %v46, 0
  %v143 = vsel %vm60, %v47, 0
  %v146 = vsel %vm60, %v48, 0
  %v149 = vsel %vm60, %v49, 0
  %v152 = vsel %vm60, %v50, 0
  %v155 = vsel %vm60, %v51, 0
  %v158 = vsel %vm60, %v52, 0
  %v161 = vsel %vm60, %v53, 0
  %v164 = vsel %vm60, %v54, 0
  %v167 = vsel %vm60, %v55, 0
  %169 = vmatpush.xpose.msra.mxu0 0.0
  %170 = vmatpush.xpose.msra.mxu0 0.0
  %171 = vmatpush.xpose.msra.mxu0 0.0
  %172 = vmatpush.xpose.msra.mxu0 0.0
  %173 = vmatpush.xpose.msra.mxu0 0.0
  %174 = vmatpush.xpose.msra.mxu0 0.0
  %175 = vmatpush.xpose.msra.mxu0 0.0
  %176 = vmatpush.xpose.msra.mxu0 0.0
  %177 = vmatpush.xpose.msra.mxu0 0.0
  %178 = vmatpush.xpose.msra.mxu0 0.0
  %179 = vmatpush.xpose.msra.mxu0 0.0
  %180 = vmatpush.xpose.msra.mxu0 0.0
  %181 = vmatpush.xpose.msra.mxu0 %v167
  %182 = vmatpush.xpose.msra.mxu0 %v164
  %183 = vmatpush.xpose.msra.mxu0 %v161
  %184 = vmatpush.xpose.msra.mxu0 %v158
  %185 = vmatmul.f32.gmra.mxu0 %v62
  %v186 = vpop.f32.mrf.mxu0
  %v187 = vadd.f32 %v58, %v186
  %188 = vmatmul.f32.gmra.mxu0 %v65
  %v189 = vpop.f32.mrf.mxu0
  %v190 = vadd.f32 %v58, %v189
  %191 = vmatmul.f32.gmra.mxu0 %v68
  %v192 = vpop.f32.mrf.mxu0
  %v193 = vadd.f32 %v58, %v192
  %194 = vmatmul.f32.gmra.mxu0 %v71
  %v195 = vpop.f32.mrf.mxu0
  %v196 = vadd.f32 %v58, %v195
  %197 = vmatmul.f32.gmra.mxu0 %v74
  %v198 = vpop.f32.mrf.mxu0
  %v199 = vadd.f32 %v58, %v198
  %200 = vmatmul.f32.gmra.mxu0 %v77
  %v201 = vpop.f32.mrf.mxu0
  %v202 = vadd.f32 %v58, %v201
  %203 = vmatmul.f32.gmra.mxu0 %v80
  %v204 = vpop.f32.mrf.mxu0
  %v205 = vadd.f32 %v58, %v204
  %206 = vmatmul.f32.gmra.mxu0 %v83
  %v207 = vpop.f32.mrf.mxu0
  %v208 = vadd.f32 %v58, %v207
  %209 = vmatmul.f32.gmra.mxu0 %v86
  %v210 = vpop.f32.mrf.mxu0
  %v211 = vadd.f32 %v58, %v210
  %212 = vmatmul.f32.gmra.mxu0 %v89
  %v213 = vpop.f32.mrf.mxu0
  %v214 = vadd.f32 %v58, %v213
  %215 = vmatmul.f32.gmra.mxu0 %v92
  %v216 = vpop.f32.mrf.mxu0
  %v217 = vadd.f32 %v58, %v216
  %218 = vmatmul.f32.gmra.mxu0 %v95
  %v219 = vpop.f32.mrf.mxu0
  %v220 = vadd.f32 %v58, %v219
  %221 = vmatmul.f32.gmra.mxu0 %v98
  %v222 = vpop.f32.mrf.mxu0
  %v223 = vadd.f32 %v58, %v222
  %224 = vmatmul.f32.gmra.mxu0 %v101
  %v225 = vpop.f32.mrf.mxu0
  %v226 = vadd.f32 %v58, %v225
  %227 = vmatmul.f32.gmra.mxu0 %v104
  %v228 = vpop.f32.mrf.mxu0
  %v229 = vadd.f32 %v58, %v228
  %230 = vmatmul.f32.gmra.mxu0 %v107
  %v231 = vpop.f32.mrf.mxu0
  %v232 = vadd.f32 %v58, %v231
  %233 = vmatmul.f32.gmra.mxu0 %v110
  %v234 = vpop.f32.mrf.mxu0
  %v235 = vadd.f32 %v58, %v234
  %236 = vmatmul.f32.gmra.mxu0 %v113
  %v237 = vpop.f32.mrf.mxu0
  %v238 = vadd.f32 %v58, %v237
  %239 = vmatmul.f32.gmra.mxu0 %v116
  %v240 = vpop.f32.mrf.mxu0
  %v241 = vadd.f32 %v58, %v240
  %242 = vmatmul.f32.gmra.mxu0 %v119
  %v243 = vpop.f32.mrf.mxu0
  %v244 = vadd.f32 %v58, %v243
  %245 = vmatmul.f32.gmra.mxu0 %v122
  %v246 = vpop.f32.mrf.mxu0
  %v247 = vadd.f32 %v58, %v246
  %248 = vmatmul.f32.gmra.mxu0 %v125
  %v249 = vpop.f32.mrf.mxu0
  %v250 = vadd.f32 %v58, %v249
  %251 = vmatmul.f32.gmra.mxu0 %v128
  %v252 = vpop.f32.mrf.mxu0
  %v253 = vadd.f32 %v58, %v252
  %254 = vmatmul.f32.gmra.mxu0 %v131
  %v255 = vpop.f32.mrf.mxu0
  %v256 = vadd.f32 %v58, %v255
  %257 = vmatmul.f32.gmra.mxu0 %v134
  %v258 = vpop.f32.mrf.mxu0
  %v259 = vadd.f32 %v58, %v258
  %260 = vmatmul.f32.gmra.mxu0 %v137
  %v261 = vpop.f32.mrf.mxu0
  %v262 = vadd.f32 %v58, %v261
  %263 = vmatmul.f32.gmra.mxu0 %v140
  %v264 = vpop.f32.mrf.mxu0
  %v265 = vadd.f32 %v58, %v264
  %266 = vmatmul.f32.gmra.mxu0 %v143
  %v267 = vpop.f32.mrf.mxu0
  %v268 = vadd.f32 %v58, %v267
  %269 = vmatmul.f32.gmra.mxu0 %v146
  %v270 = vpop.f32.mrf.mxu0
  %v271 = vadd.f32 %v58, %v270
  %272 = vmatmul.f32.gmra.mxu0 %v149
  %v273 = vpop.f32.mrf.mxu0
  %v274 = vadd.f32 %v58, %v273
  %275 = vmatmul.f32.gmra.mxu0 %v152
  %v276 = vpop.f32.mrf.mxu0
  %v277 = vadd.f32 %v58, %v276
  %278 = vmatmul.f32.gmra.mxu0 %v155
  %v279 = vpop.f32.mrf.mxu0
  %v280 = vadd.f32 %v58, %v279
  %281 = vdwg.mxu0
  %v282 = vmax.f32 %v187, 0.0
  %v283 = vmax.f32 %v190, 0.0
  %v284 = vmax.f32 %v193, 0.0
  %v285 = vmax.f32 %v196, 0.0
  %v286 = vmax.f32 %v199, 0.0
  %v287 = vmax.f32 %v202, 0.0
  %v288 = vmax.f32 %v205, 0.0
  %v289 = vmax.f32 %v208, 0.0
  %v290 = vmax.f32 %v211, 0.0
  %v291 = vmax.f32 %v214, 0.0
  %v292 = vmax.f32 %v217, 0.0
  %v293 = vmax.f32 %v220, 0.0
  %v294 = vmax.f32 %v223, 0.0
  %v295 = vmax.f32 %v226, 0.0
  %v296 = vmax.f32 %v229, 0.0
  %v297 = vmax.f32 %v232, 0.0
  %v298 = vmax.f32 %v235, 0.0
  %v299 = vmax.f32 %v238, 0.0
  %v300 = vmax.f32 %v241, 0.0
  %v301 = vmax.f32 %v244, 0.0
  %v302 = vmax.f32 %v247, 0.0
  %v303 = vmax.f32 %v250, 0.0
  %v304 = vmax.f32 %v253, 0.0
  %v305 = vmax.f32 %v256, 0.0
  %v306 = vmax.f32 %v259, 0.0
  %v307 = vmax.f32 %v262, 0.0
  %v308 = vmax.f32 %v265, 0.0
  %v309 = vmax.f32 %v268, 0.0
  %v310 = vmax.f32 %v271, 0.0
  %v311 = vmax.f32 %v274, 0.0
  %v312 = vmax.f32 %v277, 0.0
  %v313 = vmax.f32 %v280, 0.0
  %v314 = vld [vmem:[%s3] sm:$0xff]
  %v315 = vld [vmem:[%s3 + $0x8] sm:$0x3]
  %v316 = vld [vmem:[%s4] sm:$0x1]
  %v318 = vperm.slane %v316, 0
  %v321 = vsel %vm60, %v282, 0
  %v324 = vsel %vm60, %v283, 0
  %v327 = vsel %vm60, %v284, 0
  %v330 = vsel %vm60, %v285, 0
  %v333 = vsel %vm60, %v286, 0
  %v336 = vsel %vm60, %v287, 0
  %v339 = vsel %vm60, %v288, 0
  %v342 = vsel %vm60, %v289, 0
  %v345 = vsel %vm60, %v290, 0
  %v348 = vsel %vm60, %v291, 0
  %v351 = vsel %vm60, %v292, 0
  %v354 = vsel %vm60, %v293, 0
  %v357 = vsel %vm60, %v294, 0
  %v360 = vsel %vm60, %v295, 0
  %v363 = vsel %vm60, %v296, 0
  %v366 = vsel %vm60, %v297, 0
  %v369 = vsel %vm60, %v298, 0
  %v372 = vsel %vm60, %v299, 0
  %v375 = vsel %vm60, %v300, 0
  %v378 = vsel %vm60, %v301, 0
  %v381 = vsel %vm60, %v302, 0
  %v384 = vsel %vm60, %v303, 0
  %v387 = vsel %vm60, %v304, 0
  %v390 = vsel %vm60, %v305, 0
  %v393 = vsel %vm60, %v306, 0
  %v396 = vsel %vm60, %v307, 0
  %v399 = vsel %vm60, %v308, 0
  %v402 = vsel %vm60, %v309, 0
  %v405 = vsel %vm60, %v310, 0
  %v408 = vsel %vm60, %v311, 0
  %v411 = vsel %vm60, %v312, 0
  %v414 = vsel %vm60, %v313, 0
  %v417 = vsel %vm60, %v314, 0
  %v420 = vsel %vm60, %v315, 0
  %422 = vmatpush.xpose.msra.mxu0 0.0
  %423 = vmatpush.xpose.msra.mxu0 0.0
  %424 = vmatpush.xpose.msra.mxu0 0.0
  %425 = vmatpush.xpose.msra.mxu0 0.0
  %426 = vmatpush.xpose.msra.mxu0 0.0
  %427 = vmatpush.xpose.msra.mxu0 0.0
  %428 = vmatpush.xpose.msra.mxu0 0.0
  %429 = vmatpush.xpose.msra.mxu0 0.0
  %430 = vmatpush.xpose.msra.mxu0 0.0
  %431 = vmatpush.xpose.msra.mxu0 0.0
  %432 = vmatpush.xpose.msra.mxu0 0.0
  %433 = vmatpush.xpose.msra.mxu0 0.0
  %434 = vmatpush.xpose.msra.mxu0 0.0
  %435 = vmatpush.xpose.msra.mxu0 0.0
  %436 = vmatpush.xpose.msra.mxu0 %v420
  %437 = vmatpush.xpose.msra.mxu0 %v417
  %438 = vmatmul.f32.gmra.mxu0 %v321
  %v439 = vpop.f32.mrf.mxu0
  %v440 = vadd.f32 %v318, %v439
  %441 = vmatmul.f32.gmra.mxu0 %v324
  %v442 = vpop.f32.mrf.mxu0
  %v443 = vadd.f32 %v318, %v442
  %444 = vmatmul.f32.gmra.mxu0 %v327
  %v445 = vpop.f32.mrf.mxu0
  %v446 = vadd.f32 %v318, %v445
  %447 = vmatmul.f32.gmra.mxu0 %v330
  %v448 = vpop.f32.mrf.mxu0
  %v449 = vadd.f32 %v318, %v448
  %450 = vmatmul.f32.gmra.mxu0 %v333
  %v451 = vpop.f32.mrf.mxu0
  %v452 = vadd.f32 %v318, %v451
  %453 = vmatmul.f32.gmra.mxu0 %v336
  %v454 = vpop.f32.mrf.mxu0
  %v455 = vadd.f32 %v318, %v454
  %456 = vmatmul.f32.gmra.mxu0 %v339
  %v457 = vpop.f32.mrf.mxu0
  %v458 = vadd.f32 %v318, %v457
  %459 = vmatmul.f32.gmra.mxu0 %v342
  %v460 = vpop.f32.mrf.mxu0
  %v461 = vadd.f32 %v318, %v460
  %462 = vmatmul.f32.gmra.mxu0 %v345
  %v463 = vpop.f32.mrf.mxu0
  %v464 = vadd.f32 %v318, %v463
  %465 = vmatmul.f32.gmra.mxu0 %v348
  %v466 = vpop.f32.mrf.mxu0
  %v467 = vadd.f32 %v318, %v466
  %468 = vmatmul.f32.gmra.mxu0 %v351
  %v469 = vpop.f32.mrf.mxu0
  %v470 = vadd.f32 %v318, %v469
  %471 = vmatmul.f32.gmra.mxu0 %v354
  %v472 = vpop.f32.mrf.mxu0
  %v473 = vadd.f32 %v318, %v472
  %474 = vmatmul.f32.gmra.mxu0 %v357
  %v475 = vpop.f32.mrf.mxu0
  %v476 = vadd.f32 %v318, %v475
  %477 = vmatmul.f32.gmra.mxu0 %v360
  %v478 = vpop.f32.mrf.mxu0
  %v479 = vadd.f32 %v318, %v478
  %480 = vmatmul.f32.gmra.mxu0 %v363
  %v481 = vpop.f32.mrf.mxu0
  %v482 = vadd.f32 %v318, %v481
  %483 = vmatmul.f32.gmra.mxu0 %v366
  %v484 = vpop.f32.mrf.mxu0
  %v485 = vadd.f32 %v318, %v484
  %486 = vmatmul.f32.gmra.mxu0 %v369
  %v487 = vpop.f32.mrf.mxu0
  %v488 = vadd.f32 %v318, %v487
  %489 = vmatmul.f32.gmra.mxu0 %v372
  %v490 = vpop.f32.mrf.mxu0
  %v491 = vadd.f32 %v318, %v490
  %492 = vmatmul.f32.gmra.mxu0 %v375
  %v493 = vpop.f32.mrf.mxu0
  %v494 = vadd.f32 %v318, %v493
  %495 = vmatmul.f32.gmra.mxu0 %v378
  %v496 = vpop.f32.mrf.mxu0
  %v497 = vadd.f32 %v318, %v496
  %498 = vmatmul.f32.gmra.mxu0 %v381
  %v499 = vpop.f32.mrf.mxu0
  %v500 = vadd.f32 %v318, %v499
  %501 = vmatmul.f32.gmra.mxu0 %v384
  %v502 = vpop.f32.mrf.mxu0
  %v503 = vadd.f32 %v318, %v502
  %504 = vmatmul.f32.gmra.mxu0 %v387
  %v505 = vpop.f32.mrf.mxu0
  %v506 = vadd.f32 %v318, %v505
  %507 = vmatmul.f32.gmra.mxu0 %v390
  %v508 = vpop.f32.mrf.mxu0
  %v509 = vadd.f32 %v318, %v508
  %510 = vmatmul.f32.gmra.mxu0 %v393
  %v511 = vpop.f32.mrf.mxu0
  %v512 = vadd.f32 %v318, %v511
  %513 = vmatmul.f32.gmra.mxu0 %v396
  %v514 = vpop.f32.mrf.mxu0
  %v515 = vadd.f32 %v318, %v514
  %516 = vmatmul.f32.gmra.mxu0 %v399
  %v517 = vpop.f32.mrf.mxu0
  %v518 = vadd.f32 %v318, %v517
  %519 = vmatmul.f32.gmra.mxu0 %v402
  %v520 = vpop.f32.mrf.mxu0
  %v521 = vadd.f32 %v318, %v520
  %522 = vmatmul.f32.gmra.mxu0 %v405
  %v523 = vpop.f32.mrf.mxu0
  %v524 = vadd.f32 %v318, %v523
  %525 = vmatmul.f32.gmra.mxu0 %v408
  %v526 = vpop.f32.mrf.mxu0
  %v527 = vadd.f32 %v318, %v526
  %528 = vmatmul.f32.gmra.mxu0 %v411
  %v529 = vpop.f32.mrf.mxu0
  %v530 = vadd.f32 %v318, %v529
  %531 = vmatmul.f32.gmra.mxu0 %v414
  %v532 = vpop.f32.mrf.mxu0
  %v533 = vadd.f32 %v318, %v532
  %534 = vdwg.mxu0
  %vm535 = vcmask 80896
  %536 = vst.msk [vmem:[%s5] sm:$0xff] %vm535, %v440
  %537 = vst.msk [vmem:[%s5 + $0x8] sm:$0xff] %vm535, %v443
  %538 = vst.msk [vmem:[%s5 + $0x10] sm:$0xff] %vm535, %v446
  %539 = vst.msk [vmem:[%s5 + $0x18] sm:$0xff] %vm535, %v449
  %540 = vst.msk [vmem:[%s5 + $0x20] sm:$0xff] %vm535, %v452
  %541 = vst.msk [vmem:[%s5 + $0x28] sm:$0xff] %vm535, %v455
  %542 = vst.msk [vmem:[%s5 + $0x30] sm:$0xff] %vm535, %v458
  %543 = vst.msk [vmem:[%s5 + $0x38] sm:$0xff] %vm535, %v461
  %544 = vst.msk [vmem:[%s5 + $0x40] sm:$0xff] %vm535, %v464
  %545 = vst.msk [vmem:[%s5 + $0x48] sm:$0xff] %vm535, %v467
  %546 = vst.msk [vmem:[%s5 + $0x50] sm:$0xff] %vm535, %v470
  %547 = vst.msk [vmem:[%s5 + $0x58] sm:$0xff] %vm535, %v473
  %548 = vst.msk [vmem:[%s5 + $0x60] sm:$0xff] %vm535, %v476
  %549 = vst.msk [vmem:[%s5 + $0x68] sm:$0xff] %vm535, %v479
  %550 = vst.msk [vmem:[%s5 + $0x70] sm:$0xff] %vm535, %v482
  %551 = vst.msk [vmem:[%s5 + $0x78] sm:$0xff] %vm535, %v485
  %552 = vst.msk [vmem:[%s5 + $0x80] sm:$0xff] %vm535, %v488
  %553 = vst.msk [vmem:[%s5 + $0x88] sm:$0xff] %vm535, %v491
  %554 = vst.msk [vmem:[%s5 + $0x90] sm:$0xff] %vm535, %v494
  %555 = vst.msk [vmem:[%s5 + $0x98] sm:$0xff] %vm535, %v497
  %556 = vst.msk [vmem:[%s5 + $0xa0] sm:$0xff] %vm535, %v500
  %557 = vst.msk [vmem:[%s5 + $0xa8] sm:$0xff] %vm535, %v503
  %558 = vst.msk [vmem:[%s5 + $0xb0] sm:$0xff] %vm535, %v506
  %559 = vst.msk [vmem:[%s5 + $0xb8] sm:$0xff] %vm535, %v509
  %560 = vst.msk [vmem:[%s5 + $0xc0] sm:$0xff] %vm535, %v512
  %561 = vst.msk [vmem:[%s5 + $0xc8] sm:$0xff] %vm535, %v515
  %562 = vst.msk [vmem:[%s5 + $0xd0] sm:$0xff] %vm535, %v518
  %563 = vst.msk [vmem:[%s5 + $0xd8] sm:$0xff] %vm535, %v521
  %564 = vst.msk [vmem:[%s5 + $0xe0] sm:$0xff] %vm535, %v524
  %565 = vst.msk [vmem:[%s5 + $0xe8] sm:$0xff] %vm535, %v527
  %566 = vst.msk [vmem:[%s5 + $0xf0] sm:$0xff] %vm535, %v530
  %567 = vst.msk [vmem:[%s5 + $0xf8] sm:$0xff] %vm535, %v533
  // Predicated region
  $region22: #{tpu_custom_call.1} parent=0 // pred_check
    _
  $region23: #{tpu_custom_call.1} parent=0 // pred_check_branch
    %569 = sbr.rel (0) target = $region25
  $region24: #{tpu_custom_call.1} parent=0 // pred_region
    _
  $region25: #{tpu_custom_call.1} parent=0 // pred_fallthru
    _
  // Predicated region
  $region26: #{tpu_custom_call.1} parent=0 // pred_check
    _
  $region27: #{tpu_custom_call.1} parent=0 // pred_check_branch
    %571 = sbr.rel (0) target = $region29
  $region28: #{tpu_custom_call.1} parent=0 // pred_region
    _
  $region29: #{tpu_custom_call.1} parent=0 // pred_fallthru
    _

</llo_original>
